<compile_context>
chip_gen: v6e
topology: v6e:2x2x1
jax: 0.10.0
libtpu: 0.0.40
codegen_flags: <defaults>
</compile_context>

<pallas_src>
import functools

import jax
import jax.numpy as jnp
from jax.experimental import pallas as pl
from jax.experimental.pallas import tpu as pltpu


def _sharded_linear_kernel(x_ref, w_ref, o_ref, acc_ref):
    """One (shard r, m, n, k) step: acc += x[m, k] @ W[k, shard r's n-th tile]."""
    k = pl.program_id(3)

    @pl.when(k == 0)
    def _():
        acc_ref[...] = jnp.zeros_like(acc_ref)

    acc_ref[...] += jnp.dot(
        x_ref[...], w_ref[...], preferred_element_type=jnp.float32
    )

    @pl.when(k == pl.num_programs(3) - 1)
    def _():
        o_ref[...] = acc_ref[...].astype(o_ref.dtype)


def _pick_tile(dim, unit, max_tile):
    """Largest multiple of `unit` <= max_tile that divides `dim`, else `dim`."""
    cand = (max_tile // unit) * unit
    while cand >= unit:
        if dim % cand == 0:
            return cand
        cand -= unit
    return dim


@functools.partial(jax.jit, static_argnames=("world_size",))
def one_layer_model_partition_forward(x, w_full, world_size):
    """Fused forward: every rank's shard matmul writes directly into its
    column slice of the concatenated (all-gathered) output."""
    batch, in_f = x.shape
    in_f2, out_f = w_full.shape
    assert in_f == in_f2
    assert out_f % world_size == 0, "weights must split evenly along dim=1"
    out_per_rank = out_f // world_size

    out_dtype = jnp.result_type(x.dtype, w_full.dtype)

    # Tile sizes: big, hardware-aligned, and dividing their dims exactly.
    tm = _pick_tile(batch, 8, 256)          # sublane-aligned M tile
    tk = _pick_tile(in_f, 128, 512)         # lane-aligned K tile
    tn = _pick_tile(out_per_rank, 128, 512) # lane-aligned N tile (per shard)

    n_m = batch // tm if batch % tm == 0 else 1
    if batch % tm != 0:
        tm = batch
        n_m = 1
    n_k = in_f // tk if in_f % tk == 0 else 1
    if in_f % tk != 0:
        tk = in_f
        n_k = 1
    n_n = out_per_rank // tn if out_per_rank % tn == 0 else 1
    if out_per_rank % tn != 0:
        tn = out_per_rank
        n_n = 1

    # Number of N-blocks per rank: shard r's n-th column block of W / output
    # sits at global column-block index r * n_n + n (contiguous partition ==
    # partition_tensor(W, world_size, dim=1)).
    npr = n_n

    grid = (world_size, n_m, n_n, n_k)  # reduction axis last

    return pl.pallas_call(
        _sharded_linear_kernel,
        out_shape=jax.ShapeDtypeStruct((batch, out_f), out_dtype),
        grid_spec=pltpu.PrefetchScalarGridSpec(
            num_scalar_prefetch=0,
            grid=grid,
            in_specs=[
                # x: (tm, tk) tile, shared across shards and N tiles.
                pl.BlockSpec((tm, tk), lambda r, m, n, k: (m, k)),
                # W: (tk, tn) tile of rank r's contiguous column shard.
                pl.BlockSpec((tk, tn), lambda r, m, n, k: (k, r * npr + n)),
            ],
            # Each rank writes its column slice of the full output directly
            # (this IS the concatenate / all-gather). tn is a multiple of 128
            # when out_per_rank is -> lane-dense, unmasked stores.
            out_specs=pl.BlockSpec((tm, tn), lambda r, m, n, k: (m, r * npr + n)),
            scratch_shapes=[pltpu.VMEM((tm, tn), jnp.float32)],
        ),
        compiler_params=pltpu.CompilerParams(
            dimension_semantics=("parallel", "parallel", "parallel", "arbitrary"),
            vmem_limit_bytes=32 * 1024 * 1024,
        ),
    )(x, w_full)


def partition_tensor(w, world_size, dim):
    """Mirror of mlp_partition.partition_tensor (used for the reference check)."""
    return jnp.split(w, world_size, axis=dim)


if __name__ == "__main__":
    key = jax.random.PRNGKey(0)
    kx, kw = jax.random.split(key)

    # Small, hardware-aligned shapes: batch=8 (one sublane group),
    # in_features=128 (one K tile), out_features=256 split across
    # world_size=2 ranks -> per-rank output tiles are 128 lanes wide.
    batch = 8
    in_features = 128
    out_features = 256
    world_size = 2

    x = jax.random.normal(kx, (batch, in_features), dtype=jnp.float32)
    w_full = jax.random.normal(kw, (in_features, out_features), dtype=jnp.float32)

    y = one_layer_model_partition_forward(x, w_full, world_size)
    y = jax.block_until_ready(y)

    # Correctness: concatenated per-rank outputs == x @ W; also matches the
    # explicit shard-by-shard reference built with partition_tensor.
    y_ref = x @ w_full
    shards_ref = jnp.concatenate(
        [x @ w_r for w_r in partition_tensor(w_full, world_size, dim=1)], axis=-1
    )
    assert y.shape == (batch, out_features)
    assert jnp.allclose(y, y_ref, atol=1e-4, rtol=1e-4)
    assert jnp.allclose(y, shards_ref, atol=1e-4, rtol=1e-4)

    print("KERNEL_OK")
</pallas_src>

<mosaic_0001>
module attributes {stable_mosaic.version = 11 : i64} {
  func.func @_sharded_linear_kernel(%arg0: i32, %arg1: i32, %arg2: i32, %arg3: i32, %arg4: memref<8x128xf32, #tpu.memory_space<vmem>>, %arg5: memref<128x128xf32, #tpu.memory_space<vmem>>, %arg6: memref<8x128xf32, #tpu.memory_space<vmem>>, %arg7: memref<8x128xf32, #tpu.memory_space<vmem>>) attributes {dimension_semantics = [#tpu.dimension_semantics<parallel>, #tpu.dimension_semantics<parallel>, #tpu.dimension_semantics<parallel>, #tpu.dimension_semantics<arbitrary>], iteration_bounds = array<i64: 2, 1, 1, 1>, scalar_prefetch = 0 : i64, scratch_operands = 1 : i64, tpu.core_type = #tpu.core_type<tc>, window_params = [{transform_indices = @transform_0, window_bounds = array<i64: 8, 128>}, {transform_indices = @transform_1, window_bounds = array<i64: 128, 128>}, {transform_indices = @transform_2, window_bounds = array<i64: 8, 128>}]} {
    %c0_i32 = arith.constant 0 : i32
    %0 = arith.cmpi eq, %arg3, %c0_i32 : i32
    %1 = arith.extui %0 : i1 to i32
    %c0_i32_0 = arith.constant 0 : i32
    %2 = arith.cmpi ne, %1, %c0_i32_0 : i32
    scf.if %2 {
      %cst_10 = arith.constant 0.000000e+00 : f32
      %12 = vector.broadcast %cst_10 : f32 to vector<8x128xf32>
      %c0_11 = arith.constant 0 : index
      %c0_12 = arith.constant 0 : index
      %13 = vector.load %arg7[%c0_11, %c0_12] : memref<8x128xf32, #tpu.memory_space<vmem>>, vector<8x128xf32>
      tpu.vector_store %arg7[%c0_11, %c0_12], %12 {strides = array<i32>} : memref<8x128xf32, #tpu.memory_space<vmem>>, vector<8x128xf32>,
    } else {
    }
    %c0 = arith.constant 0 : index
    %c0_1 = arith.constant 0 : index
    %3 = vector.load %arg7[%c0, %c0_1] : memref<8x128xf32, #tpu.memory_space<vmem>>, vector<8x128xf32>
    %c0_2 = arith.constant 0 : index
    %c0_3 = arith.constant 0 : index
    %4 = vector.load %arg4[%c0_2, %c0_3] : memref<8x128xf32, #tpu.memory_space<vmem>>, vector<8x128xf32>
    %c0_4 = arith.constant 0 : index
    %c0_5 = arith.constant 0 : index
    %5 = vector.load %arg5[%c0_4, %c0_5] : memref<128x128xf32, #tpu.memory_space<vmem>>, vector<128x128xf32>
    %cst = arith.constant dense<0.000000e+00> : vector<8x128xf32>
    %6 = tpu.matmul %4, %5, %cst {dimension_numbers = #tpu.dot_dimension_numbers<[1], [0], [0], [1], [0, 0, 1, 1], [], []>} : vector<8x128xf32>, vector<128x128xf32>, vector<8x128xf32> -> vector<8x128xf32>
    %7 = arith.addf %3, %6 : vector<8x128xf32>
    %c0_6 = arith.constant 0 : index
    %c0_7 = arith.constant 0 : index
    %8 = vector.load %arg7[%c0_6, %c0_7] : memref<8x128xf32, #tpu.memory_space<vmem>>, vector<8x128xf32>
    tpu.vector_store %arg7[%c0_6, %c0_7], %7 {strides = array<i32>} : memref<8x128xf32, #tpu.memory_space<vmem>>, vector<8x128xf32>,
    %c0_i32_8 = arith.constant 0 : i32
    %9 = arith.cmpi eq, %arg3, %c0_i32_8 : i32
    %10 = arith.extui %9 : i1 to i32
    %c0_i32_9 = arith.constant 0 : i32
    %11 = arith.cmpi ne, %10, %c0_i32_9 : i32
    scf.if %11 {
      %c0_10 = arith.constant 0 : index
      %c0_11 = arith.constant 0 : index
      %12 = vector.load %arg7[%c0_10, %c0_11] : memref<8x128xf32, #tpu.memory_space<vmem>>, vector<8x128xf32>
      %c0_12 = arith.constant 0 : index
      %c0_13 = arith.constant 0 : index
      %13 = vector.load %arg6[%c0_12, %c0_13] : memref<8x128xf32, #tpu.memory_space<vmem>>, vector<8x128xf32>
      tpu.vector_store %arg6[%c0_12, %c0_13], %12 {strides = array<i32>} : memref<8x128xf32, #tpu.memory_space<vmem>>, vector<8x128xf32>,
    } else {
    }
    return
  }
  func.func @transform_0(%arg0: i32, %arg1: i32, %arg2: i32, %arg3: i32) -> (i32, i32) {
    %c0_i32 = arith.constant 0 : i32
    return %arg1, %arg3 : i32, i32
  }
  func.func @transform_1(%arg0: i32, %arg1: i32, %arg2: i32, %arg3: i32) -> (i32, i32) {
    %c1_i32 = arith.constant 1 : i32
    %0 = arith.muli %arg0, %c1_i32 : i32
    %1 = arith.addi %0, %arg2 : i32
    %c0_i32 = arith.constant 0 : i32
    return %arg3, %1 : i32, i32
  }
  func.func @transform_2(%arg0: i32, %arg1: i32, %arg2: i32, %arg3: i32) -> (i32, i32) {
    %c1_i32 = arith.constant 1 : i32
    %0 = arith.muli %arg0, %c1_i32 : i32
    %1 = arith.addi %0, %arg2 : i32
    %c0_i32 = arith.constant 0 : i32
    return %arg1, %1 : i32, i32
  }
}

</mosaic_0001>

<llo_original>
// kernel: one_layer_model_partition_forward.1
$region0: #{one_layer_model_partition_forward.1}
  #allocation0 [shape = 'u32[]', space=smem, size = 0x4, offset = 0x4, fixed_abs, tag = 'smem constant byte address 0x4 - core index']
  #allocation1 [shape = 'u32[144,128]{1,0:T(1,128)}', space=vmem, size = 0x12000, scoped, tag = 'internal scratch']
  #allocation2 [shape = 'f32[8,128]{1,0:T(8,128)}', space=vmem, size = 0x1000, scoped, tag = 'scratch operand']
  %s0 = inlined_call_operand.hbm [shape: f32[8,128], index: 0, kind: input, shape index: {}]
  %s1 = inlined_call_operand.hbm [shape: f32[128,256], index: 1, kind: input, shape index: {}]
  %s2 = inlined_call_operand.hbm [shape: f32[8,256], index: 2, kind: output, shape index: {}]
  %s3 = sld [smem:[#allocation0]]
  $region57: #{one_layer_model_partition_forward.1} parent=0
    _
  %s5 = ssub.s32 1, %s3
  %s6 = scalar_select 0, %s5, %s3
  $region1: #{one_layer_model_partition_forward.1} parent=0
    #allocation3 [shape = 'u8[4096]{0}', space=vmem, size = 0x1000, scoped, tag = 'input window, operand 0, single buffered']
    #allocation4 [shape = 's32[2]{0}', space=sflag, size = 0x8, scoped, tag = 'scoped memory for one_layer_model_partition_forward.1']
    #allocation5 [shape = 's32[2]{0}', space=sflag, size = 0x8, scoped, tag = 'scoped memory for one_layer_model_partition_forward.1']
    #allocation6 [shape = 'u8[131072]{0}', space=vmem, size = 0x20000, scoped, tag = 'input window, operand 1']
    #allocation7 [shape = 's32[2]{0}', space=sflag, size = 0x8, scoped, tag = 'scoped memory for one_layer_model_partition_forward.1']
    #allocation8 [shape = 'u8[8192]{0}', space=vmem, size = 0x2000, scoped, tag = 'output window, operand 0']
    %7 = vsyncpa [#allocation4], 0
    %8 = vsyncpa [#allocation7], 0
    %s9 = scalar_lea.sflag [#allocation7], 1
    %10 = vsyncpa %s9, 0
    %11 = vsyncpa [#allocation5], 0
    %s12 = scalar_lea.sflag [#allocation5], 1
    %13 = vsyncpa %s12, 0
    loop: start=0, step=1, limit=4
    $region2: #{one_layer_model_partition_forward.1} parent=1 // loop_pre_header
      _
    $region3: #{one_layer_model_partition_forward.1} parent=1 // loop_header
      %s15 = sphi 0, %s19
      %p16 = scmp.ge.s32.totalorder %s15, 4
      %s22 = sphi 0, %s48
      %s23 = sphi 0, %s44
      %s24 = sphi 0, %s40
      %s25 = sphi 0, %s36
      %s26 = sphi 0, %s22
      %s27 = sphi 0, %s23
      %s28 = sphi 0, %s24
      %s29 = sphi 0, %s25
      %s30 = sphi 0, %s26
      %s31 = sphi 0, %s27
      %s32 = sphi 0, %s28
      %s33 = sphi 0, %s29
      %s53 = sphi 0, %s55
      %s56 = sphi 0, %s53
      %s57 = sphi 0, %s56
      %s73 = sphi 0, %s57
      %s83 = sphi 0, %s85
      %s86 = sphi 0, %s83
      %s87 = sphi 0, %s86
      %s103 = sphi 0, %s87
      %s113 = sphi 0, %s115
      %s116 = sphi 0, %s113
      %s117 = sphi 0, %s116
      %s133 = sphi 0, %s117
    $region4: #{one_layer_model_partition_forward.1} parent=1 // loop_header_branch
      %18 = sbr.rel (%p16) target = $region8
    $region5: #{one_layer_model_partition_forward.1} parent=1 // loop_body
      %s20 = ssub.s32 %s15, 1
      %s21 = ssub.s32 %s15, 2
      %s34 = sadd.s32 1, %s25
      %p35 = scmp.ge.s32.totalorder %s34, 1
      %s36 = scalar_select %p35, 0, %s34
      %s37 = sadd.s32 1, %s24
      %s38 = scalar_select %p35, %s37, %s24
      %p39 = scmp.ge.s32.totalorder %s38, 1
      %s40 = scalar_select %p39, 0, %s38
      %s41 = sadd.s32 1, %s23
      %s42 = scalar_select %p39, %s41, %s23
      %p43 = scmp.ge.s32.totalorder %s42, 1
      %s44 = scalar_select %p43, 0, %s42
      %s45 = sadd.s32 1, %s22
      %s46 = scalar_select %p43, %s45, %s22
      %p47 = scmp.ge.s32.totalorder %s46, 2
      %s48 = scalar_select %p47, 0, %s46
      %s49 = ssub.s32 %s23, %s44
      %s50 = ssub.s32 %s25, %s36
      %s51 = sor.u32 %s49, %s50
      %p52 = scmp.eq.s32.totalorder %s51, 0
      %s54 = sadd.s32 %s53, 1
      %s55 = scalar_select %p52, %s53, %s54
      %p58 = pneg %p52
      %p59 = scmp.eq.s32.totalorder %s15, 1
      %p60 = por %p58, %p59
      %p61 = scmp.ne.s32.totalorder %s53, %s56
      %p62 = scmp.eq.s32.totalorder %s15, 0
      %p63 = por %p61, %p62
      %p64 = scmp.ne.s32.totalorder %s53, %s56
      %p65 = scmp.eq.s32.totalorder %s20, 1
      %p66 = por %p64, %p65
      %p67 = scmp.ne.s32.totalorder %s56, %s57
      %p68 = scmp.eq.s32.totalorder %s20, 0
      %p69 = por %p67, %p68
      %p70 = scmp.ne.s32.totalorder %s56, %s57
      %p71 = scmp.eq.s32.totalorder %s21, 1
      %p72 = por %p70, %p71
      %p74 = scmp.ne.s32.totalorder %s57, %s73
      %p75 = scmp.eq.s32.totalorder %s21, 0
      %p76 = por %p74, %p75
      %s77 = sadd.s32 %s22, %s24
      %s78 = sadd.s32 %s48, %s40
      %s79 = ssub.s32 %s25, %s36
      %s80 = ssub.s32 %s77, %s78
      %s81 = sor.u32 %s79, %s80
      %p82 = scmp.eq.s32.totalorder %s81, 0
      %s84 = sadd.s32 %s83, 1
      %s85 = scalar_select %p82, %s83, %s84
      %p88 = pneg %p82
      %p89 = scmp.eq.s32.totalorder %s15, 1
      %p90 = por %p88, %p89
      %p91 = scmp.ne.s32.totalorder %s83, %s86
      %p92 = scmp.eq.s32.totalorder %s15, 0
      %p93 = por %p91, %p92
      %p94 = scmp.ne.s32.totalorder %s83, %s86
      %p95 = scmp.eq.s32.totalorder %s20, 1
      %p96 = por %p94, %p95
      %p97 = scmp.ne.s32.totalorder %s86, %s87
      %p98 = scmp.eq.s32.totalorder %s20, 0
      %p99 = por %p97, %p98
      %p100 = scmp.ne.s32.totalorder %s86, %s87
      %p101 = scmp.eq.s32.totalorder %s21, 1
      %p102 = por %p100, %p101
      %p104 = scmp.ne.s32.totalorder %s87, %s103
      %p105 = scmp.eq.s32.totalorder %s21, 0
      %p106 = por %p104, %p105
      %s107 = sadd.s32 %s22, %s24
      %s108 = sadd.s32 %s48, %s40
      %s109 = ssub.s32 %s23, %s44
      %s110 = ssub.s32 %s107, %s108
      %s111 = sor.u32 %s109, %s110
      %p112 = scmp.eq.s32.totalorder %s111, 0
      %s114 = sadd.s32 %s113, 1
      %s115 = scalar_select %p112, %s113, %s114
      %p118 = pneg %p112
      %p119 = scmp.eq.s32.totalorder %s15, 1
      %p120 = por %p118, %p119
      %p121 = scmp.ne.s32.totalorder %s113, %s116
      %p122 = scmp.eq.s32.totalorder %s15, 0
      %p123 = por %p121, %p122
      %p124 = scmp.ne.s32.totalorder %s113, %s116
      %p125 = scmp.eq.s32.totalorder %s20, 1
      %p126 = por %p124, %p125
      %p127 = scmp.ne.s32.totalorder %s116, %s117
      %p128 = scmp.eq.s32.totalorder %s20, 0
      %p129 = por %p127, %p128
      %p130 = scmp.ne.s32.totalorder %s116, %s117
      %p131 = scmp.eq.s32.totalorder %s21, 1
      %p132 = por %p130, %p131
      %p134 = scmp.ne.s32.totalorder %s117, %s133
      %p135 = scmp.eq.s32.totalorder %s21, 0
      %p136 = por %p134, %p135
      %p137 = scmp.le.s32.totalorder 1, %s15
      %p138 = scmp.lt.s32.totalorder %s15, 3
      %p139 = pnand %p137, %p138
      %p140 = pneg %p139
      // Predicated region
      $region9: #{one_layer_model_partition_forward.1} parent=5 // pred_check
        _
      $region10: #{one_layer_model_partition_forward.1} parent=5 // pred_check_branch
        %142 = sbr.rel (%p139) target = $region12
      $region11: #{one_layer_model_partition_forward.1} parent=5 // pred_region
        %s143 = ssub.s32 %s15, 1
        // Predicated region
        $region13: #{one_layer_model_partition_forward.1} parent=11 // pred_check
          %p144 = pneg %p69
        $region14: #{one_layer_model_partition_forward.1} parent=11 // pred_check_branch
          %146 = sbr.rel (%p144) target = $region16
        $region15: #{one_layer_model_partition_forward.1} parent=11 // pred_region
          %s148 = ssub.s32 128, 128
          %149 = vsyncadd [#allocation4], %s148
          %s150 = sadd.s32 %s29, %s27
          %s151 = smul.addr %s150, 128
          %s152 = scalar_lea.hbm %s0, %s151
          %s154 = sshll.u32 [#allocation3], 4
          %s155 = int_to_ptr.vmem [resolvable:$true] %s154
          %157 = dma.hbm_to_vmem [thread:$0]  %s152, 128, %s155, [#allocation4]
        $region16: #{one_layer_model_partition_forward.1} parent=11 // pred_fallthru
          _
      $region12: #{one_layer_model_partition_forward.1} parent=5 // pred_fallthru
        _
      %p158 = scmp.lt.s32.totalorder %s15, 2
      // Predicated region
      $region17: #{one_layer_model_partition_forward.1} parent=5 // pred_check
        %p159 = pneg %p158
      $region18: #{one_layer_model_partition_forward.1} parent=5 // pred_check_branch
        %161 = sbr.rel (%p159) target = $region20
      $region19: #{one_layer_model_partition_forward.1} parent=5 // pred_region
        // Predicated region
        $region21: #{one_layer_model_partition_forward.1} parent=19 // pred_check
          %p162 = pneg %p93
        $region22: #{one_layer_model_partition_forward.1} parent=19 // pred_check_branch
          %164 = sbr.rel (%p162) target = $region24
        $region23: #{one_layer_model_partition_forward.1} parent=19 // pred_region
          %s165 = sand.u32 %s83, 1
          %s166 = scalar_lea.sflag [#allocation7], %s165
          %s167 = sand.u32 %s83, 1
          %s168 = smul.addr %s167, 128
          %s169 = scalar_lea.vmem [#allocation6], %s168
          %s170 = sadd.s32 %s22, %s24
          %s171 = smul.u32 16, %s25
          %s173 = ssub.s32 2048, 2048
          %174 = vsyncadd %s166, %s173
          %s175 = smul.addr %s171, 2
          %s176 = sadd.s32 %s170, %s175
          %s177 = smul.addr %s176, 128
          %s178 = scalar_lea.hbm %s1, %s177
          %s179 = sshll.u32 %s169, 4
          %s180 = int_to_ptr.vmem [resolvable:$true] %s179
          %185 = dma.hbm_to_vmem [thread:$0]  %s178, 2048, %s180, %s166, 256, 128, 8
        $region24: #{one_layer_model_partition_forward.1} parent=19 // pred_fallthru
          _
      $region20: #{one_layer_model_partition_forward.1} parent=5 // pred_fallthru
        _
      %p186 = scmp.le.s32.totalorder 1, %s15
      %p187 = scmp.lt.s32.totalorder %s15, 3
      %p188 = pnand %p186, %p187
      %p189 = pneg %p188
      // Predicated region
      $region25: #{one_layer_model_partition_forward.1} parent=5 // pred_check
        _
      $region26: #{one_layer_model_partition_forward.1} parent=5 // pred_check_branch
        %191 = sbr.rel (%p188) target = $region28
      $region27: #{one_layer_model_partition_forward.1} parent=5 // pred_region
        %s192 = ssub.s32 %s15, 1
        // Predicated region
        $region29: #{one_layer_model_partition_forward.1} parent=27 // pred_check
          %p193 = pneg %p69
        $region30: #{one_layer_model_partition_forward.1} parent=27 // pred_check_branch
          %195 = sbr.rel (%p193) target = $region32
        $region31: #{one_layer_model_partition_forward.1} parent=27 // pred_region
          %196 = dma.done [#allocation4], 128
        $region32: #{one_layer_model_partition_forward.1} parent=27 // pred_fallthru
          _
        %s197 = sand.u32 %s86, 1
        %s198 = scalar_lea.sflag [#allocation7], %s197
        %s199 = sand.u32 %s86, 1
        %s200 = smul.addr %s199, 128
        %s201 = scalar_lea.vmem [#allocation6], %s200
        // Predicated region
        $region33: #{one_layer_model_partition_forward.1} parent=27 // pred_check
          %p202 = pneg %p99
        $region34: #{one_layer_model_partition_forward.1} parent=27 // pred_check_branch
          %204 = sbr.rel (%p202) target = $region36
        $region35: #{one_layer_model_partition_forward.1} parent=27 // pred_region
          %205 = dma.done %s198, 2048
        $region36: #{one_layer_model_partition_forward.1} parent=27 // pred_fallthru
          _
        %p206 = pneg %p69
        %p207 = pneg %p66
        %s208 = sand.u32 %s86, 1
        %s209 = scalar_lea.sflag [#allocation7], %s208
        %s210 = sand.u32 %s86, 1
        %s211 = smul.addr %s210, 128
        %s212 = scalar_lea.vmem [#allocation6], %s211
        %p213 = pneg %p99
        %p214 = pneg %p96
        %p215 = pneg %p129
        %p216 = pneg %p126
        %s217 = sand.u32 %s116, 1
        %s218 = scalar_lea.sflag [#allocation5], %s217
        %s219 = sand.u32 %s116, 1
        %s220 = smul.addr %s219, 8
        %s221 = scalar_lea.vmem [#allocation8], %s220
        %s222 = sadd.s32 %s26, %s28
        %s223 = smul.u32 16, %s29
        %s224 = sadd.s32 %s26, %s28
        %p225 = scmp.eq.s32.totalorder %s29, 0
        // Predicated region
        $region37: #{one_layer_model_partition_forward.1} parent=27 // pred_check
          %p226 = pneg %p225
        $region38: #{one_layer_model_partition_forward.1} parent=27 // pred_check_branch
          %228 = sbr.rel (%p226) target = $region40
        $region39: #{one_layer_model_partition_forward.1} parent=27 // pred_region
          %229 = vst [vmem:[#allocation2] sm:$0xff] 0.0
        $region40: #{one_layer_model_partition_forward.1} parent=27 // pred_fallthru
          _
        %v230 = vld [vmem:[#allocation2] sm:$0xff]
        %v231 = vld [vmem:[#allocation3] sm:$0xff]
        %v232 = vld [vmem:[%s201] sm:$0xff]
        %v233 = vld [vmem:[%s201 + $0x8] sm:$0xff]
        %v234 = vld [vmem:[%s201 + $0x10] sm:$0xff]
        %v235 = vld [vmem:[%s201 + $0x18] sm:$0xff]
        %v236 = vld [vmem:[%s201 + $0x20] sm:$0xff]
        %v237 = vld [vmem:[%s201 + $0x28] sm:$0xff]
        %v238 = vld [vmem:[%s201 + $0x30] sm:$0xff]
        %v239 = vld [vmem:[%s201 + $0x38] sm:$0xff]
        %v240 = vld [vmem:[%s201 + $0x40] sm:$0xff]
        %v241 = vld [vmem:[%s201 + $0x48] sm:$0xff]
        %v242 = vld [vmem:[%s201 + $0x50] sm:$0xff]
        %v243 = vld [vmem:[%s201 + $0x58] sm:$0xff]
        %v244 = vld [vmem:[%s201 + $0x60] sm:$0xff]
        %v245 = vld [vmem:[%s201 + $0x68] sm:$0xff]
        %v246 = vld [vmem:[%s201 + $0x70] sm:$0xff]
        %v247 = vld [vmem:[%s201 + $0x78] sm:$0xff]
        %248 = vmatprep.subr.mxu0 0.0
        %249 = vmatpush1.msra.mxu0 %v247
        %250 = vmatprep.subr.mxu0 0.0
        %251 = vmatpush1.msra.mxu0 %v246
        %252 = vmatprep.subr.mxu0 0.0
        %253 = vmatpush1.msra.mxu0 %v245
        %254 = vmatprep.subr.mxu0 0.0
        %255 = vmatpush1.msra.mxu0 %v244
        %256 = vmatprep.subr.mxu0 0.0
        %257 = vmatpush1.msra.mxu0 %v243
        %258 = vmatprep.subr.mxu0 0.0
        %259 = vmatpush1.msra.mxu0 %v242
        %260 = vmatprep.subr.mxu0 0.0
        %261 = vmatpush1.msra.mxu0 %v241
        %262 = vmatprep.subr.mxu0 0.0
        %263 = vmatpush1.msra.mxu0 %v240
        %264 = vmatprep.subr.mxu0 0.0
        %265 = vmatpush1.msra.mxu0 %v239
        %266 = vmatprep.subr.mxu0 0.0
        %267 = vmatpush1.msra.mxu0 %v238
        %268 = vmatprep.subr.mxu0 0.0
        %269 = vmatpush1.msra.mxu0 %v237
        %270 = vmatprep.subr.mxu0 0.0
        %271 = vmatpush1.msra.mxu0 %v236
        %272 = vmatprep.subr.mxu0 0.0
        %273 = vmatpush1.msra.mxu0 %v235
        %274 = vmatprep.subr.mxu0 0.0
        %275 = vmatpush1.msra.mxu0 %v234
        %276 = vmatprep.subr.mxu0 0.0
        %277 = vmatpush1.msra.mxu0 %v233
        %278 = vmatprep.subr.mxu0 0.0
        %279 = vmatpush1.msra.mxu0 %v232
        %280 = vmatprep.subr.mxu0 0.0
        %281 = vmatpush2.msra.mxu0 0.0
        %282 = vmatprep.subr.mxu0 0.0
        %283 = vmatpush2.msra.mxu0 0.0
        %284 = vmatprep.subr.mxu0 0.0
        %285 = vmatpush2.msra.mxu0 0.0
        %286 = vmatprep.subr.mxu0 0.0
        %287 = vmatpush2.msra.mxu0 0.0
        %288 = vmatprep.subr.mxu0 0.0
        %289 = vmatpush2.msra.mxu0 0.0
        %290 = vmatprep.subr.mxu0 0.0
        %291 = vmatpush2.msra.mxu0 0.0
        %292 = vmatprep.subr.mxu0 0.0
        %293 = vmatpush2.msra.mxu0 0.0
        %294 = vmatprep.subr.mxu0 0.0
        %295 = vmatpush2.msra.mxu0 0.0
        %296 = vmatprep.subr.mxu0 0.0
        %297 = vmatpush2.msra.mxu0 0.0
        %298 = vmatprep.subr.mxu0 0.0
        %299 = vmatpush2.msra.mxu0 0.0
        %300 = vmatprep.subr.mxu0 0.0
        %301 = vmatpush2.msra.mxu0 0.0
        %302 = vmatprep.subr.mxu0 0.0
        %303 = vmatpush2.msra.mxu0 0.0
        %304 = vmatprep.subr.mxu0 0.0
        %305 = vmatpush2.msra.mxu0 0.0
        %306 = vmatprep.subr.mxu0 0.0
        %307 = vmatpush2.msra.mxu0 0.0
        %308 = vmatprep.subr.mxu0 0.0
        %309 = vmatpush2.msra.mxu0 0.0
        %310 = vmatprep.subr.mxu0 0.0
        %311 = vmatpush2.msra.mxu0 0.0
        %312 = vmatprep.mubr.f32.mxu0 0.0
        %313 = vmatmul.mubr.f32.gmra.mxu0 %v231
        %v314 = vpop.f32.mrf.mxu0
        %v315 = vadd.f32 0.0, %v314
        %v316 = vpop.f32.mrf.mxu0
        %317 = vdwg.mxu0
        %v318 = vadd.f32 %v230, %v315
        %319 = vst [vmem:[#allocation2] sm:$0xff] %v318
        // Predicated region
        $region41: #{one_layer_model_partition_forward.1} parent=27 // pred_check
          %p320 = pneg %p225
        $region42: #{one_layer_model_partition_forward.1} parent=27 // pred_check_branch
          %322 = sbr.rel (%p320) target = $region44
        $region43: #{one_layer_model_partition_forward.1} parent=27 // pred_region
          %v323 = vld [vmem:[#allocation2] sm:$0xff]
          %324 = vst [vmem:[%s221] sm:$0xff] %v323
        $region44: #{one_layer_model_partition_forward.1} parent=27 // pred_fallthru
          _
        %s325 = sand.u32 %s116, 1
        %s326 = scalar_lea.sflag [#allocation5], %s325
        %s327 = sand.u32 %s116, 1
        %s328 = smul.addr %s327, 8
        %s329 = scalar_lea.vmem [#allocation8], %s328
        // Predicated region
        $region45: #{one_layer_model_partition_forward.1} parent=27 // pred_check
          %p330 = pneg %p126
        $region46: #{one_layer_model_partition_forward.1} parent=27 // pred_check_branch
          %332 = sbr.rel (%p330) target = $region48
        $region47: #{one_layer_model_partition_forward.1} parent=27 // pred_region
          %s333 = sadd.s32 %s26, %s28
          %s335 = ssub.s32 128, 128
          %336 = vsyncadd %s326, %s335
          %s337 = smul.addr %s27, 2
          %s338 = sadd.s32 %s333, %s337
          %s339 = smul.addr %s338, 128
          %s340 = scalar_lea.hbm %s2, %s339
          %s342 = sshll.u32 %s329, 4
          %s343 = int_to_ptr.vmem [resolvable:$true] %s342
          %345 = dma.vmem_to_hbm [thread:$0]  %s343, 128, %s340, %s326
        $region48: #{one_layer_model_partition_forward.1} parent=27 // pred_fallthru
          _
      $region28: #{one_layer_model_partition_forward.1} parent=5 // pred_fallthru
        _
      %p346 = scmp.le.s32.totalorder 2, %s15
      // Predicated region
      $region49: #{one_layer_model_partition_forward.1} parent=5 // pred_check
        %p347 = pneg %p346
      $region50: #{one_layer_model_partition_forward.1} parent=5 // pred_check_branch
        %349 = sbr.rel (%p347) target = $region52
      $region51: #{one_layer_model_partition_forward.1} parent=5 // pred_region
        %s350 = ssub.s32 %s15, 2
        // Predicated region
        $region53: #{one_layer_model_partition_forward.1} parent=51 // pred_check
          %p351 = pneg %p132
        $region54: #{one_layer_model_partition_forward.1} parent=51 // pred_check_branch
          %353 = sbr.rel (%p351) target = $region56
        $region55: #{one_layer_model_partition_forward.1} parent=51 // pred_region
          %s354 = sand.u32 %s117, 1
          %s355 = scalar_lea.sflag [#allocation5], %s354
          %s356 = sand.u32 %s117, 1
          %s357 = smul.addr %s356, 8
          %s358 = scalar_lea.vmem [#allocation8], %s357
          %359 = dma.done %s355, 128
        $region56: #{one_layer_model_partition_forward.1} parent=51 // pred_fallthru
          _
      $region52: #{one_layer_model_partition_forward.1} parent=5 // pred_fallthru
        _
    $region6: #{one_layer_model_partition_forward.1} parent=1 // loop_footer
      %s19 = sadd.s32 1, %s15
    $region7: #{one_layer_model_partition_forward.1} parent=1 // loop_footer_branch
      %14 = sbr.rel target = $region3
    $region8: #{one_layer_model_partition_forward.1} parent=1 // loop_exit
      _
    %360 = vsyncpa [#allocation4], 1
    %s361 = scalar_lea.sflag [#allocation4], 1
    %362 = vsyncpa %s361, 1
    %363 = vsyncpa [#allocation7], 1
    %s364 = scalar_lea.sflag [#allocation7], 1
    %365 = vsyncpa %s364, 1
    %366 = vsyncpa [#allocation5], 1
    %s367 = scalar_lea.sflag [#allocation5], 1
    %368 = vsyncpa %s367, 1

</llo_original>
